<compile_context>
chip_gen: v6e
topology: v6e:2x2x1
jax: 0.10.0
libtpu: 0.0.40
codegen_flags: <defaults>
</compile_context>

<pallas_src>
import jax
import jax.numpy as jnp
from jax import lax
from jax.experimental import pallas as pl
from jax.experimental.pallas import tpu as pltpu


def _make_kernel(n_real, nb_classes, K, la, gamma_inv, tau, margin,
                 include_reg, mxu_dtype):
    inv_n = 1.0 / float(n_real)
    reg_denom = float(nb_classes * K * (K - 1.0)) if K > 1 else 1.0

    def kernel(x_ref, t_ref, p_ref, o_ref):
        i = pl.program_id(0)

        # ---- L2 normalize rows in f32 (EUP rsqrt; matches F.normalize eps=1e-12) ----
        X = x_ref[...]                                               # (tn, D) f32
        xn = X * lax.rsqrt(jnp.maximum(jnp.sum(X * X, axis=-1, keepdims=True), 1e-24))
        P = p_ref[...]                                               # (K, C, D) f32
        pn = P * lax.rsqrt(jnp.maximum(jnp.sum(P * P, axis=-1, keepdims=True), 1e-24))

        # ---- K-slab similarities + per-class softmax over K, all lane-dense (N,C) ----
        xn_m = xn.astype(mxu_dtype)
        pn_m = pn.astype(mxu_dtype)
        num = None
        den = None
        for k in range(K):                       # static unroll; K is small
            sim_k = lax.dot_general(xn_m, pn_m[k], (((1,), (1,)), ((), ())),
                                    preferred_element_type=jnp.float32)  # (tn, C) f32
            # |sim_k| <= 1 (cosines) so exp(gamma_inv * sim_k) cannot overflow in f32;
            # the per-row max subtraction (XLU lane reduction over CK) is dropped.
            e_k = jnp.exp(gamma_inv * sim_k)
            num = e_k * sim_k if num is None else num + e_k * sim_k
            den = e_k if den is None else den + e_k
        sim_class = num * pl.reciprocal(den, approx=False)           # (tn, C)

        # ---- one-hot labels built in-kernel; padded rows carry label -1 -> zero row ----
        cls = lax.broadcasted_iota(jnp.int32, sim_class.shape, 1)
        t1h = (cls == t_ref[...]).astype(jnp.float32)                # (tn, C)

        # ---- margin cross-entropy; keep the max in the outer log-softmax (scale ~ la) ----
        logits = la * (sim_class - margin * t1h)
        m = jnp.max(logits, axis=-1, keepdims=True)
        lse = m + jnp.log(jnp.sum(jnp.exp(logits - m), axis=-1, keepdims=True))
        o_ref[0, 0] = jnp.sum(t1h * (lse - logits)) * inv_n          # partial of loss.mean()

        if include_reg:                            # static python branch (tau>0 and K>1)
            @pl.when(i == 0)                       # batch-independent: add once only
            def _():
                # block-diagonal regularizer: per-class (K,K) gram entries only,
                # O(C*K^2*D) instead of the (CK,CK) gram + (CK,CK) mask.
                reg_sum = jnp.float32(0.0)
                for a in range(K):
                    for b in range(a + 1, K):
                        dot_ab = jnp.sum(pn[a] * pn[b], axis=-1, keepdims=True)  # (C,1)
                        reg_sum = reg_sum + jnp.sum(jnp.sqrt(2.0 + 1e-5 - 2.0 * dot_ab))
                o_ref[0, 0] = o_ref[0, 0] + tau * (reg_sum / reg_denom)

    return kernel


def soft_triple_forward(X, indices, T, proxies, *, la, gamma, tau, margin, K,
                        nb_classes, tile_n=None, mxu_dtype=jnp.float32):
    """Pallas implementation of SoftTriple.forward. `gamma` is the constructor arg
    (the module uses 1/gamma internally). `mxu_dtype=jnp.bfloat16` enables bf16 MXU
    operands (f32 accumulation) for v6e/v7x."""
    del indices  # unused, exactly as in the PyTorch forward
    n, d_emb = X.shape
    C = nb_classes
    gamma_inv = 1.0 / gamma
    include_reg = (tau > 0 and K > 1)

    # N-tile: multiple of 8, proxies stay resident across the grid.
    if tile_n is None:
        tile_n = min(512, 8 * pl.cdiv(n, 8))
    tile_n = max(8, (tile_n // 8) * 8)
    num_tiles = pl.cdiv(n, tile_n)
    n_pad = num_tiles * tile_n

    # Pad batch; padded rows get label -1 (never matches a class -> zero loss term).
    Xp = jnp.pad(X.astype(jnp.float32), ((0, n_pad - n), (0, 0)))
    Tp = jnp.pad(T.astype(jnp.int32), (0, n_pad - n), constant_values=-1).reshape(n_pad, 1)
    # (C*K, D) -> (K, C, D): slab k holds proxy k of every class (original row c*K + k).
    P_r = proxies.astype(jnp.float32).reshape(C, K, d_emb).transpose(1, 0, 2)

    # TODO(synk): the original calls binarize_and_smooth_labels with nb_classes=len(P)=C*K,
    # which is shape-inconsistent with simClass (N, C) for K>1; we use one-hot-over-C
    # semantics (smoothing_const == 0), the clearly intended behavior.
    kernel = _make_kernel(n, C, K, la, gamma_inv, tau, margin, include_reg, mxu_dtype)

    flops = 2 * n * C * K * d_emb + (C * K * (K - 1) * d_emb if include_reg else 0)
    cost = pl.CostEstimate(
        flops=int(flops),
        transcendentals=int(n * C * K + 2 * n + C * K),
        bytes_accessed=int(4 * (n_pad * d_emb + K * C * d_emb + n_pad + num_tiles)))

    # Rough VMEM budget: resident proxies + double-buffered X/T tiles + intermediates.
    est = 4 * (2 * K * C * d_emb + 2 * (tile_n * d_emb + tile_n)
               + 8 * tile_n * C + 2 * tile_n * d_emb)
    vmem_limit = int(min(max(2 * est, 32 << 20), 48 << 20))  # safe on v7x's 64 MiB VMEM

    out = pl.pallas_call(
        kernel,
        out_shape=jax.ShapeDtypeStruct((num_tiles, 1), jnp.float32),
        grid=(num_tiles,),
        in_specs=[
            pl.BlockSpec((tile_n, d_emb), lambda i: (i, 0)),          # X tile (pipelined)
            pl.BlockSpec((tile_n, 1), lambda i: (i, 0)),              # labels tile (int32)
            pl.BlockSpec((K, C, d_emb), lambda i: (0, 0, 0)),         # proxies, resident
        ],
        out_specs=pl.BlockSpec((1, 1), lambda i: (i, 0),
                               memory_space=pltpu.MemorySpace.SMEM),  # per-tile partial
        compiler_params=pltpu.CompilerParams(
            dimension_semantics=("parallel",),                        # megacore on v7x
            vmem_limit_bytes=vmem_limit),
        cost_estimate=cost,
    )(Xp, Tp, P_r)
    return jnp.sum(out[:, 0])


def soft_triple_ref(X, T, proxies, *, la, gamma, tau, margin, K, nb_classes):
    """Pure-JAX reference (direct translation of the PyTorch forward)."""
    gamma_inv = 1.0 / gamma
    Pn = proxies / jnp.maximum(jnp.linalg.norm(proxies, axis=-1, keepdims=True), 1e-12)
    Xn = X / jnp.maximum(jnp.linalg.norm(X, axis=-1, keepdims=True), 1e-12)
    simInd = Xn @ Pn.T
    simStruc = simInd.reshape(-1, nb_classes, K)
    prob = jax.nn.softmax(simStruc * gamma_inv, axis=2)
    simClass = jnp.sum(prob * simStruc, axis=2)
    T1h = jax.nn.one_hot(T, nb_classes, dtype=jnp.float32)
    loss = jnp.sum(-T1h * jax.nn.log_softmax(la * (simClass - margin * T1h), axis=-1), axis=-1)
    if tau > 0 and K > 1:
        CK = nb_classes * K
        ck = jnp.arange(CK)
        mask = ((ck[:, None] // K) == (ck[None, :] // K)) & (ck[None, :] > ck[:, None])
        simCenter = Pn @ Pn.T
        reg = jnp.sum(jnp.where(mask, jnp.sqrt(2.0 + 1e-5 - 2.0 * simCenter), 0.0))
        reg = reg / (nb_classes * K * (K - 1.0))
        return loss.mean() + tau * reg
    return loss.mean()


if __name__ == "__main__":
    # SoftTriple(la=20, gamma=0.1, tau=0.2, margin=0.01, K=4, nb_classes=8, sz_embed=32)
    la, gamma, tau, margin = 20.0, 0.1, 0.2, 0.01
    C, K, D = 8, 4, 32

    key = jax.random.PRNGKey(0)
    kx, kp, kt, kx2, kt2 = jax.random.split(key, 5)

    # --- case 1: single tile, f32 MXU path, tight tolerance ---
    N = 8
    X = jax.random.normal(kx, (N, D), dtype=jnp.float32)
    # kaiming_normal_(mode='fan_out') on a (C*K, D) tensor: std = sqrt(2 / (C*K))
    proxies = jax.random.normal(kp, (C * K, D), dtype=jnp.float32) * jnp.sqrt(2.0 / (C * K))
    T = jax.random.randint(kt, (N,), 0, C, dtype=jnp.int32)
    indices = jnp.arange(N, dtype=jnp.int32)  # unused by forward, kept for fidelity

    out = soft_triple_forward(X, indices, T, proxies, la=la, gamma=gamma, tau=tau,
                              margin=margin, K=K, nb_classes=C)
    out = jax.block_until_ready(out)
    ref = soft_triple_ref(X, T, proxies, la=la, gamma=gamma, tau=tau,
                          margin=margin, K=K, nb_classes=C)
    assert jnp.allclose(out, ref, atol=1e-4, rtol=1e-4), (float(out), float(ref))

    # --- case 2: multi-tile grid (N not a multiple of the tile), exercises padding,
    #     per-tile partial-loss outputs, and regularizer-added-once-on-tile-0 ---
    N2 = 20
    X2 = jax.random.normal(kx2, (N2, D), dtype=jnp.float32)
    T2 = jax.random.randint(kt2, (N2,), 0, C, dtype=jnp.int32)
    out2 = soft_triple_forward(X2, jnp.arange(N2, dtype=jnp.int32), T2, proxies,
                               la=la, gamma=gamma, tau=tau, margin=margin,
                               K=K, nb_classes=C, tile_n=8)
    out2 = jax.block_until_ready(out2)
    ref2 = soft_triple_ref(X2, T2, proxies, la=la, gamma=gamma, tau=tau,
                           margin=margin, K=K, nb_classes=C)
    assert jnp.allclose(out2, ref2, atol=1e-4, rtol=1e-4), (float(out2), float(ref2))

    # --- case 3: bf16 MXU operands (v6e/v7x fast path), f32 accumulation; loose check ---
    out_bf16 = soft_triple_forward(X, indices, T, proxies, la=la, gamma=gamma, tau=tau,
                                   margin=margin, K=K, nb_classes=C,
                                   mxu_dtype=jnp.bfloat16)
    out_bf16 = jax.block_until_ready(out_bf16)
    rel = abs(float(out_bf16) - float(ref)) / max(abs(float(ref)), 1e-6)
    assert jnp.isfinite(out_bf16) and rel < 0.25, (float(out_bf16), float(ref), rel)

    print("KERNEL_OK")
</pallas_src>

<mosaic_0001>
module attributes {stable_mosaic.version = 11 : i64} {
  func.func @kernel(%arg0: i32, %arg1: memref<8x32xf32, #tpu.memory_space<vmem>>, %arg2: memref<8x1xi32, #tpu.memory_space<vmem>>, %arg3: memref<4x8x32xf32, #tpu.memory_space<vmem>>, %arg4: memref<1x1xf32, #tpu.memory_space<smem>>) attributes {dimension_semantics = [#tpu.dimension_semantics<parallel>], iteration_bounds = array<i64: 1>, scalar_prefetch = 0 : i64, scratch_operands = 0 : i64, tpu.core_type = #tpu.core_type<tc>, window_params = [{transform_indices = @transform_0, window_bounds = array<i64: 8, 32>}, {transform_indices = @transform_1, window_bounds = array<i64: 8, 1>}, {pipeline_mode = #tpu.pipeline_mode<synchronous>, transform_indices = @transform_2, window_bounds = array<i64: 4, 8, 32>}, {transform_indices = @transform_3, window_bounds = array<i64: 1, 1>}]} {
    %c0 = arith.constant 0 : index
    %c0_0 = arith.constant 0 : index
    %0 = vector.load %arg1[%c0, %c0_0] : memref<8x32xf32, #tpu.memory_space<vmem>>, vector<8x32xf32>
    %1 = arith.mulf %0, %0 : vector<8x32xf32>
    %cst = arith.constant dense<0.000000e+00> : vector<8xf32>
    %2 = vector.multi_reduction <add>, %1, %cst [1] : vector<8x32xf32> to vector<8xf32>
    %3 = vector.shape_cast %2 : vector<8xf32> to vector<8x1xf32>
    %cst_1 = arith.constant 1.000000e-24 : f32
    %4 = vector.broadcast %cst_1 : f32 to vector<8x1xf32>
    %5 = arith.maximumf %3, %4 : vector<8x1xf32>
    %6 = math.rsqrt %5 : vector<8x1xf32>
    %7 = vector.broadcast %6 : vector<8x1xf32> to vector<8x32xf32>
    %8 = arith.mulf %0, %7 : vector<8x32xf32>
    %c0_2 = arith.constant 0 : index
    %c0_3 = arith.constant 0 : index
    %c0_4 = arith.constant 0 : index
    %9 = vector.load %arg3[%c0_2, %c0_3, %c0_4] : memref<4x8x32xf32, #tpu.memory_space<vmem>>, vector<4x8x32xf32>
    %10 = arith.mulf %9, %9 : vector<4x8x32xf32>
    %cst_5 = arith.constant dense<0.000000e+00> : vector<4x8xf32>
    %11 = vector.multi_reduction <add>, %10, %cst_5 [2] : vector<4x8x32xf32> to vector<4x8xf32>
    %12 = vector.shape_cast %11 : vector<4x8xf32> to vector<4x8x1xf32>
    %cst_6 = arith.constant 1.000000e-24 : f32
    %13 = vector.broadcast %cst_6 : f32 to vector<4x8x1xf32>
    %14 = arith.maximumf %12, %13 : vector<4x8x1xf32>
    %15 = math.rsqrt %14 : vector<4x8x1xf32>
    %16 = vector.broadcast %15 : vector<4x8x1xf32> to vector<4x8x32xf32>
    %17 = arith.mulf %9, %16 : vector<4x8x32xf32>
    %18 = vector.extract_strided_slice %17 {offsets = [0, 0, 0], sizes = [1, 8, 32], strides = [1, 1, 1]} : vector<4x8x32xf32> to vector<1x8x32xf32>
    %19 = vector.shape_cast %18 : vector<1x8x32xf32> to vector<8x32xf32>
    %cst_7 = arith.constant dense<0.000000e+00> : vector<8x8xf32>
    %20 = tpu.matmul %8, %19, %cst_7 {dimension_numbers = #tpu.dot_dimension_numbers<[1], [1], [0], [0], [0, 0, 1, 0], [], []>} : vector<8x32xf32>, vector<8x32xf32>, vector<8x8xf32> -> vector<8x8xf32>
    %cst_8 = arith.constant 1.000000e+01 : f32
    %21 = vector.broadcast %cst_8 : f32 to vector<8x8xf32>
    %22 = arith.mulf %21, %20 : vector<8x8xf32>
    %23 = math.exp %22 : vector<8x8xf32>
    %24 = arith.mulf %23, %20 : vector<8x8xf32>
    %25 = vector.extract_strided_slice %17 {offsets = [1, 0, 0], sizes = [1, 8, 32], strides = [1, 1, 1]} : vector<4x8x32xf32> to vector<1x8x32xf32>
    %26 = vector.shape_cast %25 : vector<1x8x32xf32> to vector<8x32xf32>
    %cst_9 = arith.constant dense<0.000000e+00> : vector<8x8xf32>
    %27 = tpu.matmul %8, %26, %cst_9 {dimension_numbers = #tpu.dot_dimension_numbers<[1], [1], [0], [0], [0, 0, 1, 0], [], []>} : vector<8x32xf32>, vector<8x32xf32>, vector<8x8xf32> -> vector<8x8xf32>
    %cst_10 = arith.constant 1.000000e+01 : f32
    %28 = vector.broadcast %cst_10 : f32 to vector<8x8xf32>
    %29 = arith.mulf %28, %27 : vector<8x8xf32>
    %30 = math.exp %29 : vector<8x8xf32>
    %31 = arith.mulf %30, %27 : vector<8x8xf32>
    %32 = arith.addf %24, %31 : vector<8x8xf32>
    %33 = arith.addf %23, %30 : vector<8x8xf32>
    %34 = vector.extract_strided_slice %17 {offsets = [2, 0, 0], sizes = [1, 8, 32], strides = [1, 1, 1]} : vector<4x8x32xf32> to vector<1x8x32xf32>
    %35 = vector.shape_cast %34 : vector<1x8x32xf32> to vector<8x32xf32>
    %cst_11 = arith.constant dense<0.000000e+00> : vector<8x8xf32>
    %36 = tpu.matmul %8, %35, %cst_11 {dimension_numbers = #tpu.dot_dimension_numbers<[1], [1], [0], [0], [0, 0, 1, 0], [], []>} : vector<8x32xf32>, vector<8x32xf32>, vector<8x8xf32> -> vector<8x8xf32>
    %cst_12 = arith.constant 1.000000e+01 : f32
    %37 = vector.broadcast %cst_12 : f32 to vector<8x8xf32>
    %38 = arith.mulf %37, %36 : vector<8x8xf32>
    %39 = math.exp %38 : vector<8x8xf32>
    %40 = arith.mulf %39, %36 : vector<8x8xf32>
    %41 = arith.addf %32, %40 : vector<8x8xf32>
    %42 = arith.addf %33, %39 : vector<8x8xf32>
    %43 = vector.extract_strided_slice %17 {offsets = [3, 0, 0], sizes = [1, 8, 32], strides = [1, 1, 1]} : vector<4x8x32xf32> to vector<1x8x32xf32>
    %44 = vector.shape_cast %43 : vector<1x8x32xf32> to vector<8x32xf32>
    %cst_13 = arith.constant dense<0.000000e+00> : vector<8x8xf32>
    %45 = tpu.matmul %8, %44, %cst_13 {dimension_numbers = #tpu.dot_dimension_numbers<[1], [1], [0], [0], [0, 0, 1, 0], [], []>} : vector<8x32xf32>, vector<8x32xf32>, vector<8x8xf32> -> vector<8x8xf32>
    %cst_14 = arith.constant 1.000000e+01 : f32
    %46 = vector.broadcast %cst_14 : f32 to vector<8x8xf32>
    %47 = arith.mulf %46, %45 : vector<8x8xf32>
    %48 = math.exp %47 : vector<8x8xf32>
    %49 = arith.mulf %48, %45 : vector<8x8xf32>
    %50 = arith.addf %41, %49 : vector<8x8xf32>
    %51 = arith.addf %42, %48 : vector<8x8xf32>
    %52 = tpu.reciprocal %51 : vector<8x8xf32> -> vector<8x8xf32>
    %53 = arith.mulf %50, %52 : vector<8x8xf32>
    %54 = tpu.iota {dimensions = array<i32: 1>} : vector<8x8xi32>
    %c0_15 = arith.constant 0 : index
    %c0_16 = arith.constant 0 : index
    %55 = vector.load %arg2[%c0_15, %c0_16] : memref<8x1xi32, #tpu.memory_space<vmem>>, vector<8x1xi32>
    %56 = vector.broadcast %55 : vector<8x1xi32> to vector<8x8xi32>
    %57 = arith.cmpi eq, %54, %56 : vector<8x8xi32>
    %58 = arith.extui %57 : vector<8x8xi1> to vector<8x8xi32>
    %59 = arith.sitofp %58 : vector<8x8xi32> to vector<8x8xf32>
    %cst_17 = arith.constant 0.00999999977 : f32
    %60 = vector.broadcast %cst_17 : f32 to vector<8x8xf32>
    %61 = arith.mulf %60, %59 : vector<8x8xf32>
    %62 = arith.subf %53, %61 : vector<8x8xf32>
    %cst_18 = arith.constant 2.000000e+01 : f32
    %63 = vector.broadcast %cst_18 : f32 to vector<8x8xf32>
    %64 = arith.mulf %63, %62 : vector<8x8xf32>
    %cst_19 = arith.constant dense<0xFF800000> : vector<8xf32>
    %65 = vector.multi_reduction <maximumf>, %64, %cst_19 [1] : vector<8x8xf32> to vector<8xf32>
    %66 = vector.shape_cast %65 : vector<8xf32> to vector<8x1xf32>
    %67 = vector.broadcast %66 : vector<8x1xf32> to vector<8x8xf32>
    %68 = arith.subf %64, %67 : vector<8x8xf32>
    %69 = math.exp %68 : vector<8x8xf32>
    %cst_20 = arith.constant dense<0.000000e+00> : vector<8xf32>
    %70 = vector.multi_reduction <add>, %69, %cst_20 [1] : vector<8x8xf32> to vector<8xf32>
    %71 = vector.shape_cast %70 : vector<8xf32> to vector<8x1xf32>
    %72 = math.log %71 : vector<8x1xf32>
    %73 = arith.addf %66, %72 : vector<8x1xf32>
    %74 = vector.broadcast %73 : vector<8x1xf32> to vector<8x8xf32>
    %75 = arith.subf %74, %64 : vector<8x8xf32>
    %76 = arith.mulf %59, %75 : vector<8x8xf32>
    %77 = vector.shape_cast %76 : vector<8x8xf32> to vector<1x8x8xf32>
    %cst_21 = arith.constant dense<0.000000e+00> : vector<1xf32>
    %78 = vector.multi_reduction <add>, %77, %cst_21 [1, 2] : vector<1x8x8xf32> to vector<1xf32>
    %79 = vector.shape_cast %78 : vector<1xf32> to vector<1x1x1xf32>
    %80 = vector.extract %79[0, 0, 0] : f32 from vector<1x1x1xf32>
    %cst_22 = arith.constant 1.250000e-01 : f32
    %81 = arith.mulf %80, %cst_22 : f32
    %c0_23 = arith.constant 0 : index
    %c0_24 = arith.constant 0 : index
    %82 = memref.load %arg4[%c0_23, %c0_24] : memref<1x1xf32, #tpu.memory_space<smem>>
    memref.store %81, %arg4[%c0_23, %c0_24] : memref<1x1xf32, #tpu.memory_space<smem>>
    %c0_i32 = arith.constant 0 : i32
    %83 = arith.cmpi eq, %arg0, %c0_i32 : i32
    %84 = arith.extui %83 : i1 to i32
    %c0_i32_25 = arith.constant 0 : i32
    %85 = arith.cmpi ne, %84, %c0_i32_25 : i32
    scf.if %85 {
      %86 = vector.extract_strided_slice %17 {offsets = [0, 0, 0], sizes = [1, 8, 32], strides = [1, 1, 1]} : vector<4x8x32xf32> to vector<1x8x32xf32>
      %87 = vector.shape_cast %86 : vector<1x8x32xf32> to vector<8x32xf32>
      %88 = vector.extract_strided_slice %17 {offsets = [1, 0, 0], sizes = [1, 8, 32], strides = [1, 1, 1]} : vector<4x8x32xf32> to vector<1x8x32xf32>
      %89 = vector.shape_cast %88 : vector<1x8x32xf32> to vector<8x32xf32>
      %90 = arith.mulf %87, %89 : vector<8x32xf32>
      %cst_26 = arith.constant dense<0.000000e+00> : vector<8xf32>
      %91 = vector.multi_reduction <add>, %90, %cst_26 [1] : vector<8x32xf32> to vector<8xf32>
      %92 = vector.shape_cast %91 : vector<8xf32> to vector<8x1xf32>
      %cst_27 = arith.constant 2.000000e+00 : f32
      %93 = vector.broadcast %cst_27 : f32 to vector<8x1xf32>
      %94 = arith.mulf %93, %92 : vector<8x1xf32>
      %cst_28 = arith.constant 2.000010e+00 : f32
      %95 = vector.broadcast %cst_28 : f32 to vector<8x1xf32>
      %96 = arith.subf %95, %94 : vector<8x1xf32>
      %97 = math.sqrt %96 : vector<8x1xf32>
      %98 = vector.shape_cast %97 : vector<8x1xf32> to vector<1x8x1xf32>
      %cst_29 = arith.constant dense<0.000000e+00> : vector<1xf32>
      %99 = vector.multi_reduction <add>, %98, %cst_29 [1, 2] : vector<1x8x1xf32> to vector<1xf32>
      %100 = vector.shape_cast %99 : vector<1xf32> to vector<1x1x1xf32>
      %101 = vector.extract %100[0, 0, 0] : f32 from vector<1x1x1xf32>
      %cst_30 = arith.constant 0.000000e+00 : f32
      %102 = arith.addf %cst_30, %101 : f32
      %103 = vector.extract_strided_slice %17 {offsets = [0, 0, 0], sizes = [1, 8, 32], strides = [1, 1, 1]} : vector<4x8x32xf32> to vector<1x8x32xf32>
      %104 = vector.shape_cast %103 : vector<1x8x32xf32> to vector<8x32xf32>
      %105 = vector.extract_strided_slice %17 {offsets = [2, 0, 0], sizes = [1, 8, 32], strides = [1, 1, 1]} : vector<4x8x32xf32> to vector<1x8x32xf32>
      %106 = vector.shape_cast %105 : vector<1x8x32xf32> to vector<8x32xf32>
      %107 = arith.mulf %104, %106 : vector<8x32xf32>
      %cst_31 = arith.constant dense<0.000000e+00> : vector<8xf32>
      %108 = vector.multi_reduction <add>, %107, %cst_31 [1] : vector<8x32xf32> to vector<8xf32>
      %109 = vector.shape_cast %108 : vector<8xf32> to vector<8x1xf32>
      %cst_32 = arith.constant 2.000000e+00 : f32
      %110 = vector.broadcast %cst_32 : f32 to vector<8x1xf32>
      %111 = arith.mulf %110, %109 : vector<8x1xf32>
      %cst_33 = arith.constant 2.000010e+00 : f32
      %112 = vector.broadcast %cst_33 : f32 to vector<8x1xf32>
      %113 = arith.subf %112, %111 : vector<8x1xf32>
      %114 = math.sqrt %113 : vector<8x1xf32>
      %115 = vector.shape_cast %114 : vector<8x1xf32> to vector<1x8x1xf32>
      %cst_34 = arith.constant dense<0.000000e+00> : vector<1xf32>
      %116 = vector.multi_reduction <add>, %115, %cst_34 [1, 2] : vector<1x8x1xf32> to vector<1xf32>
      %117 = vector.shape_cast %116 : vector<1xf32> to vector<1x1x1xf32>
      %118 = vector.extract %117[0, 0, 0] : f32 from vector<1x1x1xf32>
      %119 = arith.addf %102, %118 : f32
      %120 = vector.extract_strided_slice %17 {offsets = [0, 0, 0], sizes = [1, 8, 32], strides = [1, 1, 1]} : vector<4x8x32xf32> to vector<1x8x32xf32>
      %121 = vector.shape_cast %120 : vector<1x8x32xf32> to vector<8x32xf32>
      %122 = vector.extract_strided_slice %17 {offsets = [3, 0, 0], sizes = [1, 8, 32], strides = [1, 1, 1]} : vector<4x8x32xf32> to vector<1x8x32xf32>
      %123 = vector.shape_cast %122 : vector<1x8x32xf32> to vector<8x32xf32>
      %124 = arith.mulf %121, %123 : vector<8x32xf32>
      %cst_35 = arith.constant dense<0.000000e+00> : vector<8xf32>
      %125 = vector.multi_reduction <add>, %124, %cst_35 [1] : vector<8x32xf32> to vector<8xf32>
      %126 = vector.shape_cast %125 : vector<8xf32> to vector<8x1xf32>
      %cst_36 = arith.constant 2.000000e+00 : f32
      %127 = vector.broadcast %cst_36 : f32 to vector<8x1xf32>
      %128 = arith.mulf %127, %126 : vector<8x1xf32>
      %cst_37 = arith.constant 2.000010e+00 : f32
      %129 = vector.broadcast %cst_37 : f32 to vector<8x1xf32>
      %130 = arith.subf %129, %128 : vector<8x1xf32>
      %131 = math.sqrt %130 : vector<8x1xf32>
      %132 = vector.shape_cast %131 : vector<8x1xf32> to vector<1x8x1xf32>
      %cst_38 = arith.constant dense<0.000000e+00> : vector<1xf32>
      %133 = vector.multi_reduction <add>, %132, %cst_38 [1, 2] : vector<1x8x1xf32> to vector<1xf32>
      %134 = vector.shape_cast %133 : vector<1xf32> to vector<1x1x1xf32>
      %135 = vector.extract %134[0, 0, 0] : f32 from vector<1x1x1xf32>
      %136 = arith.addf %119, %135 : f32
      %137 = vector.extract_strided_slice %17 {offsets = [1, 0, 0], sizes = [1, 8, 32], strides = [1, 1, 1]} : vector<4x8x32xf32> to vector<1x8x32xf32>
      %138 = vector.shape_cast %137 : vector<1x8x32xf32> to vector<8x32xf32>
      %139 = vector.extract_strided_slice %17 {offsets = [2, 0, 0], sizes = [1, 8, 32], strides = [1, 1, 1]} : vector<4x8x32xf32> to vector<1x8x32xf32>
      %140 = vector.shape_cast %139 : vector<1x8x32xf32> to vector<8x32xf32>
      %141 = arith.mulf %138, %140 : vector<8x32xf32>
      %cst_39 = arith.constant dense<0.000000e+00> : vector<8xf32>
      %142 = vector.multi_reduction <add>, %141, %cst_39 [1] : vector<8x32xf32> to vector<8xf32>
      %143 = vector.shape_cast %142 : vector<8xf32> to vector<8x1xf32>
      %cst_40 = arith.constant 2.000000e+00 : f32
      %144 = vector.broadcast %cst_40 : f32 to vector<8x1xf32>
      %145 = arith.mulf %144, %143 : vector<8x1xf32>
      %cst_41 = arith.constant 2.000010e+00 : f32
      %146 = vector.broadcast %cst_41 : f32 to vector<8x1xf32>
      %147 = arith.subf %146, %145 : vector<8x1xf32>
      %148 = math.sqrt %147 : vector<8x1xf32>
      %149 = vector.shape_cast %148 : vector<8x1xf32> to vector<1x8x1xf32>
      %cst_42 = arith.constant dense<0.000000e+00> : vector<1xf32>
      %150 = vector.multi_reduction <add>, %149, %cst_42 [1, 2] : vector<1x8x1xf32> to vector<1xf32>
      %151 = vector.shape_cast %150 : vector<1xf32> to vector<1x1x1xf32>
      %152 = vector.extract %151[0, 0, 0] : f32 from vector<1x1x1xf32>
      %153 = arith.addf %136, %152 : f32
      %154 = vector.extract_strided_slice %17 {offsets = [1, 0, 0], sizes = [1, 8, 32], strides = [1, 1, 1]} : vector<4x8x32xf32> to vector<1x8x32xf32>
      %155 = vector.shape_cast %154 : vector<1x8x32xf32> to vector<8x32xf32>
      %156 = vector.extract_strided_slice %17 {offsets = [3, 0, 0], sizes = [1, 8, 32], strides = [1, 1, 1]} : vector<4x8x32xf32> to vector<1x8x32xf32>
      %157 = vector.shape_cast %156 : vector<1x8x32xf32> to vector<8x32xf32>
      %158 = arith.mulf %155, %157 : vector<8x32xf32>
      %cst_43 = arith.constant dense<0.000000e+00> : vector<8xf32>
      %159 = vector.multi_reduction <add>, %158, %cst_43 [1] : vector<8x32xf32> to vector<8xf32>
      %160 = vector.shape_cast %159 : vector<8xf32> to vector<8x1xf32>
      %cst_44 = arith.constant 2.000000e+00 : f32
      %161 = vector.broadcast %cst_44 : f32 to vector<8x1xf32>
      %162 = arith.mulf %161, %160 : vector<8x1xf32>
      %cst_45 = arith.constant 2.000010e+00 : f32
      %163 = vector.broadcast %cst_45 : f32 to vector<8x1xf32>
      %164 = arith.subf %163, %162 : vector<8x1xf32>
      %165 = math.sqrt %164 : vector<8x1xf32>
      %166 = vector.shape_cast %165 : vector<8x1xf32> to vector<1x8x1xf32>
      %cst_46 = arith.constant dense<0.000000e+00> : vector<1xf32>
      %167 = vector.multi_reduction <add>, %166, %cst_46 [1, 2] : vector<1x8x1xf32> to vector<1xf32>
      %168 = vector.shape_cast %167 : vector<1xf32> to vector<1x1x1xf32>
      %169 = vector.extract %168[0, 0, 0] : f32 from vector<1x1x1xf32>
      %170 = arith.addf %153, %169 : f32
      %171 = vector.extract_strided_slice %17 {offsets = [2, 0, 0], sizes = [1, 8, 32], strides = [1, 1, 1]} : vector<4x8x32xf32> to vector<1x8x32xf32>
      %172 = vector.shape_cast %171 : vector<1x8x32xf32> to vector<8x32xf32>
      %173 = vector.extract_strided_slice %17 {offsets = [3, 0, 0], sizes = [1, 8, 32], strides = [1, 1, 1]} : vector<4x8x32xf32> to vector<1x8x32xf32>
      %174 = vector.shape_cast %173 : vector<1x8x32xf32> to vector<8x32xf32>
      %175 = arith.mulf %172, %174 : vector<8x32xf32>
      %cst_47 = arith.constant dense<0.000000e+00> : vector<8xf32>
      %176 = vector.multi_reduction <add>, %175, %cst_47 [1] : vector<8x32xf32> to vector<8xf32>
      %177 = vector.shape_cast %176 : vector<8xf32> to vector<8x1xf32>
      %cst_48 = arith.constant 2.000000e+00 : f32
      %178 = vector.broadcast %cst_48 : f32 to vector<8x1xf32>
      %179 = arith.mulf %178, %177 : vector<8x1xf32>
      %cst_49 = arith.constant 2.000010e+00 : f32
      %180 = vector.broadcast %cst_49 : f32 to vector<8x1xf32>
      %181 = arith.subf %180, %179 : vector<8x1xf32>
      %182 = math.sqrt %181 : vector<8x1xf32>
      %183 = vector.shape_cast %182 : vector<8x1xf32> to vector<1x8x1xf32>
      %cst_50 = arith.constant dense<0.000000e+00> : vector<1xf32>
      %184 = vector.multi_reduction <add>, %183, %cst_50 [1, 2] : vector<1x8x1xf32> to vector<1xf32>
      %185 = vector.shape_cast %184 : vector<1xf32> to vector<1x1x1xf32>
      %186 = vector.extract %185[0, 0, 0] : f32 from vector<1x1x1xf32>
      %187 = arith.addf %170, %186 : f32
      %c0_51 = arith.constant 0 : index
      %c0_52 = arith.constant 0 : index
      %188 = memref.load %arg4[%c0_51, %c0_52] : memref<1x1xf32, #tpu.memory_space<smem>>
      %cst_53 = arith.constant 9.600000e+01 : f32
      %189 = arith.divf %187, %cst_53 : f32
      %cst_54 = arith.constant 2.000000e-01 : f32
      %190 = arith.mulf %cst_54, %189 : f32
      %191 = arith.addf %188, %190 : f32
      %c0_55 = arith.constant 0 : index
      %c0_56 = arith.constant 0 : index
      %192 = memref.load %arg4[%c0_55, %c0_56] : memref<1x1xf32, #tpu.memory_space<smem>>
      memref.store %191, %arg4[%c0_55, %c0_56] : memref<1x1xf32, #tpu.memory_space<smem>>
    } else {
    }
    return
  }
  func.func @transform_0(%arg0: i32) -> (i32, i32) {
    %c0_i32 = arith.constant 0 : i32
    %c0_i32_0 = arith.constant 0 : i32
    return %arg0, %c0_i32 : i32, i32
  }
  func.func @transform_1(%arg0: i32) -> (i32, i32) {
    %c0_i32 = arith.constant 0 : i32
    %c0_i32_0 = arith.constant 0 : i32
    return %arg0, %c0_i32 : i32, i32
  }
  func.func @transform_2(%arg0: i32) -> (i32, i32, i32) {
    %c0_i32 = arith.constant 0 : i32
    %c0_i32_0 = arith.constant 0 : i32
    %c0_i32_1 = arith.constant 0 : i32
    %c0_i32_2 = arith.constant 0 : i32
    return %c0_i32, %c0_i32_0, %c0_i32_1 : i32, i32, i32
  }
  func.func @transform_3(%arg0: i32) -> (i32, i32) {
    %c0_i32 = arith.constant 0 : i32
    %c0_i32_0 = arith.constant 0 : i32
    return %arg0, %c0_i32 : i32, i32
  }
}

</mosaic_0001>

<llo_original>
// kernel: tpu_custom_call.1
$region0: #{tpu_custom_call.1}
  #allocation0 [shape = 'u32[]', space=smem, size = 0x4, offset = 0x4, fixed_abs, tag = 'smem constant byte address 0x4 - core index']
  #allocation1 [shape = 'u32[144,128]{1,0:T(1,128)}', space=vmem, size = 0x12000, scoped, tag = 'internal scratch']
  %s0 = inlined_call_operand.vmem [shape: f32[8,32], index: 0, kind: input, shape index: {}]
  %s1 = inlined_call_operand.vmem [shape: s32[8,1], index: 1, kind: input, shape index: {}]
  %s2 = inlined_call_operand.hbm [shape: f32[4,8,32], index: 2, kind: input, shape index: {}]
  %s3 = inlined_call_operand.hbm [shape: f32[1,1], index: 3, kind: output, shape index: {}]
  %s4 = sld [smem:[#allocation0]]
  $region30: #{tpu_custom_call.1} parent=0
    _
  %s6 = ssub.s32 1, %s4
  %s7 = scalar_select 0, %s6, %s4
  $region1: #{tpu_custom_call.1} parent=0
    #allocation2 [shape = 'u8[16384]{0}', space=vmem, size = 0x4000, scoped, tag = 'input window, operand 2, single buffered']
    #allocation3 [shape = 's32[1]{0}', space=sflag, size = 0x4, scoped, tag = 'scoped memory for tpu_custom_call.1']
    #allocation4 [shape = 's32[1]{0}', space=sflag, size = 0x4, scoped, tag = 'scoped memory for tpu_custom_call.1']
    #allocation5 [shape = 'u8[512]{0}', space=smem, size = 0x200, scoped, tag = 'output window, operand 0, single buffered']
    %8 = vsyncpa [#allocation3], 0
    %9 = vsyncpa [#allocation4], 0
    // Predicated region
    $region2: #{tpu_custom_call.1} parent=1 // pred_check
      _
    $region3: #{tpu_custom_call.1} parent=1 // pred_check_branch
      %11 = sbr.rel (0) target = $region5
    $region4: #{tpu_custom_call.1} parent=1 // pred_region
      _
    $region5: #{tpu_custom_call.1} parent=1 // pred_fallthru
      _
    // Predicated region
    $region6: #{tpu_custom_call.1} parent=1 // pred_check
      _
    $region7: #{tpu_custom_call.1} parent=1 // pred_check_branch
      %13 = sbr.rel (0) target = $region9
    $region8: #{tpu_custom_call.1} parent=1 // pred_region
      _
    $region9: #{tpu_custom_call.1} parent=1 // pred_fallthru
      _
    // Predicated region
    $region10: #{tpu_custom_call.1} parent=1 // pred_check
      _
    $region11: #{tpu_custom_call.1} parent=1 // pred_check_branch
      %15 = sbr.rel (0) target = $region13
    $region12: #{tpu_custom_call.1} parent=1 // pred_region
      %s17 = ssub.s32 512, 512
      %18 = vsyncadd [#allocation3], %s17
      %s19 = sshll.u32 [#allocation2], 4
      %s20 = int_to_ptr.vmem [resolvable:$true] %s19
      %25 = dma.hbm_to_vmem [thread:$0]  %s2, 512, %s20, [#allocation3], 128, 128, 8
    $region13: #{tpu_custom_call.1} parent=1 // pred_fallthru
      _
    // Predicated region
    $region14: #{tpu_custom_call.1} parent=1 // pred_check
      _
    $region15: #{tpu_custom_call.1} parent=1 // pred_check_branch
      %27 = sbr.rel (0) target = $region17
    $region16: #{tpu_custom_call.1} parent=1 // pred_region
      %28 = dma.done [#allocation3], 512
    $region17: #{tpu_custom_call.1} parent=1 // pred_fallthru
      _
    %v29 = vld [vmem:[%s0] sm:$0xff]
    %v30 = vmul.f32 %v29, %v29
    %vm31 = vcmask 261120
    %v32 = vsel %vm31, %v30, 0.0
    %33 = vadd.xlane.f32.xlu0 %v32
    %v34 = vpop.xlane.xlu0 %33
    %v35 = vmax.f32 %v34, 1e-24
    %v36 = vrsqrt.pop %v35
    %v37 = vmul.f32 %v29, %v36
    %v38 = vld [vmem:[#allocation2] sm:$0xff]
    %v39 = vld [vmem:[#allocation2 + $0x8] sm:$0xff]
    %v40 = vld [vmem:[#allocation2 + $0x10] sm:$0xff]
    %v41 = vld [vmem:[#allocation2 + $0x18] sm:$0xff]
    %v42 = vmul.f32 %v38, %v38
    %v43 = vmul.f32 %v39, %v39
    %v44 = vmul.f32 %v40, %v40
    %v45 = vmul.f32 %v41, %v41
    %v46 = vsel %vm31, %v42, 0.0
    %47 = vadd.xlane.f32.xlu0 %v46
    %v48 = vpop.xlane.xlu0 %47
    %v49 = vsel %vm31, %v43, 0.0
    %50 = vadd.xlane.f32.xlu0 %v49
    %v51 = vpop.xlane.xlu0 %50
    %v52 = vsel %vm31, %v44, 0.0
    %53 = vadd.xlane.f32.xlu0 %v52
    %v54 = vpop.xlane.xlu0 %53
    %v55 = vsel %vm31, %v45, 0.0
    %56 = vadd.xlane.f32.xlu0 %v55
    %v57 = vpop.xlane.xlu0 %56
    %v58 = vmax.f32 %v48, 1e-24
    %v59 = vmax.f32 %v51, 1e-24
    %v60 = vmax.f32 %v54, 1e-24
    %v61 = vmax.f32 %v57, 1e-24
    %v62 = vrsqrt.pop %v58
    %v63 = vrsqrt.pop %v59
    %v64 = vrsqrt.pop %v60
    %v65 = vrsqrt.pop %v61
    %v66 = vmul.f32 %v38, %v62
    %v67 = vmul.f32 %v39, %v63
    %v68 = vmul.f32 %v40, %v64
    %v69 = vmul.f32 %v41, %v65
    %v71 = vsel %vm31, %v37, 0
    %v74 = vsel %vm31, %v66, 0
    %76 = vmatprep.subr.mxu0 0.0
    %77 = vmatpush1.xpose.msra.mxu0 0.0
    %78 = vmatprep.subr.mxu0 0.0
    %79 = vmatpush1.xpose.msra.mxu0 0.0
    %80 = vmatprep.subr.mxu0 0.0
    %81 = vmatpush1.xpose.msra.mxu0 0.0
    %82 = vmatprep.subr.mxu0 0.0
    %83 = vmatpush1.xpose.msra.mxu0 0.0
    %84 = vmatprep.subr.mxu0 0.0
    %85 = vmatpush1.xpose.msra.mxu0 0.0
    %86 = vmatprep.subr.mxu0 0.0
    %87 = vmatpush1.xpose.msra.mxu0 0.0
    %88 = vmatprep.subr.mxu0 0.0
    %89 = vmatpush1.xpose.msra.mxu0 0.0
    %90 = vmatprep.subr.mxu0 0.0
    %91 = vmatpush1.xpose.msra.mxu0 0.0
    %92 = vmatprep.subr.mxu0 0.0
    %93 = vmatpush1.xpose.msra.mxu0 0.0
    %94 = vmatprep.subr.mxu0 0.0
    %95 = vmatpush1.xpose.msra.mxu0 0.0
    %96 = vmatprep.subr.mxu0 0.0
    %97 = vmatpush1.xpose.msra.mxu0 0.0
    %98 = vmatprep.subr.mxu0 0.0
    %99 = vmatpush1.xpose.msra.mxu0 0.0
    %100 = vmatprep.subr.mxu0 0.0
    %101 = vmatpush1.xpose.msra.mxu0 0.0
    %102 = vmatprep.subr.mxu0 0.0
    %103 = vmatpush1.xpose.msra.mxu0 0.0
    %104 = vmatprep.subr.mxu0 0.0
    %105 = vmatpush1.xpose.msra.mxu0 0.0
    %106 = vmatprep.subr.mxu0 0.0
    %107 = vmatpush1.xpose.msra.mxu0 %v74
    %108 = vmatprep.subr.mxu0 0.0
    %109 = vmatpush2.xpose.msra.mxu0 0.0
    %110 = vmatprep.subr.mxu0 0.0
    %111 = vmatpush2.xpose.msra.mxu0 0.0
    %112 = vmatprep.subr.mxu0 0.0
    %113 = vmatpush2.xpose.msra.mxu0 0.0
    %114 = vmatprep.subr.mxu0 0.0
    %115 = vmatpush2.xpose.msra.mxu0 0.0
    %116 = vmatprep.subr.mxu0 0.0
    %117 = vmatpush2.xpose.msra.mxu0 0.0
    %118 = vmatprep.subr.mxu0 0.0
    %119 = vmatpush2.xpose.msra.mxu0 0.0
    %120 = vmatprep.subr.mxu0 0.0
    %121 = vmatpush2.xpose.msra.mxu0 0.0
    %122 = vmatprep.subr.mxu0 0.0
    %123 = vmatpush2.xpose.msra.mxu0 0.0
    %124 = vmatprep.subr.mxu0 0.0
    %125 = vmatpush2.xpose.msra.mxu0 0.0
    %126 = vmatprep.subr.mxu0 0.0
    %127 = vmatpush2.xpose.msra.mxu0 0.0
    %128 = vmatprep.subr.mxu0 0.0
    %129 = vmatpush2.xpose.msra.mxu0 0.0
    %130 = vmatprep.subr.mxu0 0.0
    %131 = vmatpush2.xpose.msra.mxu0 0.0
    %132 = vmatprep.subr.mxu0 0.0
    %133 = vmatpush2.xpose.msra.mxu0 0.0
    %134 = vmatprep.subr.mxu0 0.0
    %135 = vmatpush2.xpose.msra.mxu0 0.0
    %136 = vmatprep.subr.mxu0 0.0
    %137 = vmatpush2.xpose.msra.mxu0 0.0
    %138 = vmatprep.subr.mxu0 0.0
    %139 = vmatpush2.xpose.msra.mxu0 0.0
    %140 = vmatprep.mubr.f32.mxu0 0.0
    %141 = vmatmul.mubr.f32.gmra.mxu0 %v71
    %v142 = vpop.f32.mrf.mxu0
    %v143 = vadd.f32 0.0, %v142
    %v144 = vpop.f32.mrf.mxu0
    %145 = vdwg.mxu0
    %v146 = vmul.f32 %v143, 10.0
    %v147 = vmul.f32 %v146, 1.442695
    %v148 = vpow.pop %v147
    %v149 = vmul.f32 %v148, %v143
    %v151 = vsel %vm31, %v67, 0
    %153 = vmatprep.subr.mxu0 0.0
    %154 = vmatpush1.xpose.msra.mxu0 0.0
    %155 = vmatprep.subr.mxu0 0.0
    %156 = vmatpush1.xpose.msra.mxu0 0.0
    %157 = vmatprep.subr.mxu0 0.0
    %158 = vmatpush1.xpose.msra.mxu0 0.0
    %159 = vmatprep.subr.mxu0 0.0
    %160 = vmatpush1.xpose.msra.mxu0 0.0
    %161 = vmatprep.subr.mxu0 0.0
    %162 = vmatpush1.xpose.msra.mxu0 0.0
    %163 = vmatprep.subr.mxu0 0.0
    %164 = vmatpush1.xpose.msra.mxu0 0.0
    %165 = vmatprep.subr.mxu0 0.0
    %166 = vmatpush1.xpose.msra.mxu0 0.0
    %167 = vmatprep.subr.mxu0 0.0
    %168 = vmatpush1.xpose.msra.mxu0 0.0
    %169 = vmatprep.subr.mxu0 0.0
    %170 = vmatpush1.xpose.msra.mxu0 0.0
    %171 = vmatprep.subr.mxu0 0.0
    %172 = vmatpush1.xpose.msra.mxu0 0.0
    %173 = vmatprep.subr.mxu0 0.0
    %174 = vmatpush1.xpose.msra.mxu0 0.0
    %175 = vmatprep.subr.mxu0 0.0
    %176 = vmatpush1.xpose.msra.mxu0 0.0
    %177 = vmatprep.subr.mxu0 0.0
    %178 = vmatpush1.xpose.msra.mxu0 0.0
    %179 = vmatprep.subr.mxu0 0.0
    %180 = vmatpush1.xpose.msra.mxu0 0.0
    %181 = vmatprep.subr.mxu0 0.0
    %182 = vmatpush1.xpose.msra.mxu0 0.0
    %183 = vmatprep.subr.mxu0 0.0
    %184 = vmatpush1.xpose.msra.mxu0 %v151
    %185 = vmatprep.subr.mxu0 0.0
    %186 = vmatpush2.xpose.msra.mxu0 0.0
    %187 = vmatprep.subr.mxu0 0.0
    %188 = vmatpush2.xpose.msra.mxu0 0.0
    %189 = vmatprep.subr.mxu0 0.0
    %190 = vmatpush2.xpose.msra.mxu0 0.0
    %191 = vmatprep.subr.mxu0 0.0
    %192 = vmatpush2.xpose.msra.mxu0 0.0
    %193 = vmatprep.subr.mxu0 0.0
    %194 = vmatpush2.xpose.msra.mxu0 0.0
    %195 = vmatprep.subr.mxu0 0.0
    %196 = vmatpush2.xpose.msra.mxu0 0.0
    %197 = vmatprep.subr.mxu0 0.0
    %198 = vmatpush2.xpose.msra.mxu0 0.0
    %199 = vmatprep.subr.mxu0 0.0
    %200 = vmatpush2.xpose.msra.mxu0 0.0
    %201 = vmatprep.subr.mxu0 0.0
    %202 = vmatpush2.xpose.msra.mxu0 0.0
    %203 = vmatprep.subr.mxu0 0.0
    %204 = vmatpush2.xpose.msra.mxu0 0.0
    %205 = vmatprep.subr.mxu0 0.0
    %206 = vmatpush2.xpose.msra.mxu0 0.0
    %207 = vmatprep.subr.mxu0 0.0
    %208 = vmatpush2.xpose.msra.mxu0 0.0
    %209 = vmatprep.subr.mxu0 0.0
    %210 = vmatpush2.xpose.msra.mxu0 0.0
    %211 = vmatprep.subr.mxu0 0.0
    %212 = vmatpush2.xpose.msra.mxu0 0.0
    %213 = vmatprep.subr.mxu0 0.0
    %214 = vmatpush2.xpose.msra.mxu0 0.0
    %215 = vmatprep.subr.mxu0 0.0
    %216 = vmatpush2.xpose.msra.mxu0 0.0
    %217 = vmatprep.mubr.f32.mxu0 0.0
    %218 = vmatmul.mubr.f32.gmra.mxu0 %v71
    %v219 = vpop.f32.mrf.mxu0
    %v220 = vadd.f32 0.0, %v219
    %v221 = vpop.f32.mrf.mxu0
    %222 = vdwg.mxu0
    %v223 = vmul.f32 %v220, 10.0
    %v224 = vmul.f32 %v223, 1.442695
    %v225 = vpow.pop %v224
    %v226 = vmul.f32 %v225, %v220
    %v227 = vadd.f32 %v149, %v226
    %v228 = vadd.f32 %v148, %v225
    %v230 = vsel %vm31, %v68, 0
    %232 = vmatprep.subr.mxu0 0.0
    %233 = vmatpush1.xpose.msra.mxu0 0.0
    %234 = vmatprep.subr.mxu0 0.0
    %235 = vmatpush1.xpose.msra.mxu0 0.0
    %236 = vmatprep.subr.mxu0 0.0
    %237 = vmatpush1.xpose.msra.mxu0 0.0
    %238 = vmatprep.subr.mxu0 0.0
    %239 = vmatpush1.xpose.msra.mxu0 0.0
    %240 = vmatprep.subr.mxu0 0.0
    %241 = vmatpush1.xpose.msra.mxu0 0.0
    %242 = vmatprep.subr.mxu0 0.0
    %243 = vmatpush1.xpose.msra.mxu0 0.0
    %244 = vmatprep.subr.mxu0 0.0
    %245 = vmatpush1.xpose.msra.mxu0 0.0
    %246 = vmatprep.subr.mxu0 0.0
    %247 = vmatpush1.xpose.msra.mxu0 0.0
    %248 = vmatprep.subr.mxu0 0.0
    %249 = vmatpush1.xpose.msra.mxu0 0.0
    %250 = vmatprep.subr.mxu0 0.0
    %251 = vmatpush1.xpose.msra.mxu0 0.0
    %252 = vmatprep.subr.mxu0 0.0
    %253 = vmatpush1.xpose.msra.mxu0 0.0
    %254 = vmatprep.subr.mxu0 0.0
    %255 = vmatpush1.xpose.msra.mxu0 0.0
    %256 = vmatprep.subr.mxu0 0.0
    %257 = vmatpush1.xpose.msra.mxu0 0.0
    %258 = vmatprep.subr.mxu0 0.0
    %259 = vmatpush1.xpose.msra.mxu0 0.0
    %260 = vmatprep.subr.mxu0 0.0
    %261 = vmatpush1.xpose.msra.mxu0 0.0
    %262 = vmatprep.subr.mxu0 0.0
    %263 = vmatpush1.xpose.msra.mxu0 %v230
    %264 = vmatprep.subr.mxu0 0.0
    %265 = vmatpush2.xpose.msra.mxu0 0.0
    %266 = vmatprep.subr.mxu0 0.0
    %267 = vmatpush2.xpose.msra.mxu0 0.0
    %268 = vmatprep.subr.mxu0 0.0
    %269 = vmatpush2.xpose.msra.mxu0 0.0
    %270 = vmatprep.subr.mxu0 0.0
    %271 = vmatpush2.xpose.msra.mxu0 0.0
    %272 = vmatprep.subr.mxu0 0.0
    %273 = vmatpush2.xpose.msra.mxu0 0.0
    %274 = vmatprep.subr.mxu0 0.0
    %275 = vmatpush2.xpose.msra.mxu0 0.0
    %276 = vmatprep.subr.mxu0 0.0
    %277 = vmatpush2.xpose.msra.mxu0 0.0
    %278 = vmatprep.subr.mxu0 0.0
    %279 = vmatpush2.xpose.msra.mxu0 0.0
    %280 = vmatprep.subr.mxu0 0.0
    %281 = vmatpush2.xpose.msra.mxu0 0.0
    %282 = vmatprep.subr.mxu0 0.0
    %283 = vmatpush2.xpose.msra.mxu0 0.0
    %284 = vmatprep.subr.mxu0 0.0
    %285 = vmatpush2.xpose.msra.mxu0 0.0
    %286 = vmatprep.subr.mxu0 0.0
    %287 = vmatpush2.xpose.msra.mxu0 0.0
    %288 = vmatprep.subr.mxu0 0.0
    %289 = vmatpush2.xpose.msra.mxu0 0.0
    %290 = vmatprep.subr.mxu0 0.0
    %291 = vmatpush2.xpose.msra.mxu0 0.0
    %292 = vmatprep.subr.mxu0 0.0
    %293 = vmatpush2.xpose.msra.mxu0 0.0
    %294 = vmatprep.subr.mxu0 0.0
    %295 = vmatpush2.xpose.msra.mxu0 0.0
    %296 = vmatprep.mubr.f32.mxu0 0.0
    %297 = vmatmul.mubr.f32.gmra.mxu0 %v71
    %v298 = vpop.f32.mrf.mxu0
    %v299 = vadd.f32 0.0, %v298
    %v300 = vpop.f32.mrf.mxu0
    %301 = vdwg.mxu0
    %v302 = vmul.f32 %v299, 10.0
    %v303 = vmul.f32 %v302, 1.442695
    %v304 = vpow.pop %v303
    %v305 = vmul.f32 %v304, %v299
    %v306 = vadd.f32 %v227, %v305
    %v307 = vadd.f32 %v228, %v304
    %v309 = vsel %vm31, %v69, 0
    %311 = vmatprep.subr.mxu0 0.0
    %312 = vmatpush1.xpose.msra.mxu0 0.0
    %313 = vmatprep.subr.mxu0 0.0
    %314 = vmatpush1.xpose.msra.mxu0 0.0
    %315 = vmatprep.subr.mxu0 0.0
    %316 = vmatpush1.xpose.msra.mxu0 0.0
    %317 = vmatprep.subr.mxu0 0.0
    %318 = vmatpush1.xpose.msra.mxu0 0.0
    %319 = vmatprep.subr.mxu0 0.0
    %320 = vmatpush1.xpose.msra.mxu0 0.0
    %321 = vmatprep.subr.mxu0 0.0
    %322 = vmatpush1.xpose.msra.mxu0 0.0
    %323 = vmatprep.subr.mxu0 0.0
    %324 = vmatpush1.xpose.msra.mxu0 0.0
    %325 = vmatprep.subr.mxu0 0.0
    %326 = vmatpush1.xpose.msra.mxu0 0.0
    %327 = vmatprep.subr.mxu0 0.0
    %328 = vmatpush1.xpose.msra.mxu0 0.0
    %329 = vmatprep.subr.mxu0 0.0
    %330 = vmatpush1.xpose.msra.mxu0 0.0
    %331 = vmatprep.subr.mxu0 0.0
    %332 = vmatpush1.xpose.msra.mxu0 0.0
    %333 = vmatprep.subr.mxu0 0.0
    %334 = vmatpush1.xpose.msra.mxu0 0.0
    %335 = vmatprep.subr.mxu0 0.0
    %336 = vmatpush1.xpose.msra.mxu0 0.0
    %337 = vmatprep.subr.mxu0 0.0
    %338 = vmatpush1.xpose.msra.mxu0 0.0
    %339 = vmatprep.subr.mxu0 0.0
    %340 = vmatpush1.xpose.msra.mxu0 0.0
    %341 = vmatprep.subr.mxu0 0.0
    %342 = vmatpush1.xpose.msra.mxu0 %v309
    %343 = vmatprep.subr.mxu0 0.0
    %344 = vmatpush2.xpose.msra.mxu0 0.0
    %345 = vmatprep.subr.mxu0 0.0
    %346 = vmatpush2.xpose.msra.mxu0 0.0
    %347 = vmatprep.subr.mxu0 0.0
    %348 = vmatpush2.xpose.msra.mxu0 0.0
    %349 = vmatprep.subr.mxu0 0.0
    %350 = vmatpush2.xpose.msra.mxu0 0.0
    %351 = vmatprep.subr.mxu0 0.0
    %352 = vmatpush2.xpose.msra.mxu0 0.0
    %353 = vmatprep.subr.mxu0 0.0
    %354 = vmatpush2.xpose.msra.mxu0 0.0
    %355 = vmatprep.subr.mxu0 0.0
    %356 = vmatpush2.xpose.msra.mxu0 0.0
    %357 = vmatprep.subr.mxu0 0.0
    %358 = vmatpush2.xpose.msra.mxu0 0.0
    %359 = vmatprep.subr.mxu0 0.0
    %360 = vmatpush2.xpose.msra.mxu0 0.0
    %361 = vmatprep.subr.mxu0 0.0
    %362 = vmatpush2.xpose.msra.mxu0 0.0
    %363 = vmatprep.subr.mxu0 0.0
    %364 = vmatpush2.xpose.msra.mxu0 0.0
    %365 = vmatprep.subr.mxu0 0.0
    %366 = vmatpush2.xpose.msra.mxu0 0.0
    %367 = vmatprep.subr.mxu0 0.0
    %368 = vmatpush2.xpose.msra.mxu0 0.0
    %369 = vmatprep.subr.mxu0 0.0
    %370 = vmatpush2.xpose.msra.mxu0 0.0
    %371 = vmatprep.subr.mxu0 0.0
    %372 = vmatpush2.xpose.msra.mxu0 0.0
    %373 = vmatprep.subr.mxu0 0.0
    %374 = vmatpush2.xpose.msra.mxu0 0.0
    %375 = vmatprep.mubr.f32.mxu0 0.0
    %376 = vmatmul.mubr.f32.gmra.mxu0 %v71
    %v377 = vpop.f32.mrf.mxu0
    %v378 = vadd.f32 0.0, %v377
    %v379 = vpop.f32.mrf.mxu0
    %380 = vdwg.mxu0
    %v381 = vmul.f32 %v378, 10.0
    %v382 = vmul.f32 %v381, 1.442695
    %v383 = vpow.pop %v382
    %v384 = vmul.f32 %v383, %v378
    %v385 = vadd.f32 %v306, %v384
    %v386 = vadd.f32 %v307, %v383
    %v387 = vrcp.pop %v386
    %v388 = vmul.f32 %v385, %v387
    %v389 = vlaneseq
    %v390 = vand.u32 %v389, 127
    %v391 = vld [vmem:[%s1] sm:$0xff]
    %392 = vset.pattern.permute.xlu0 0
    %393 = vperm.xlu0 %392, %v391
    %v394 = vpop.permute.xlu0 %393
    %vm395 = vcmp.eq.s32.totalorder %v390, %v394
    %v396 = vsel %vm395, 1, 0
    %v397 = vcvt.s32.f32 %v396
    %v398 = vmul.f32 %v397, 0.01
    %v399 = vsub.f32 %v388, %v398
    %v400 = vmul.f32 %v399, 20.0
    %vm401 = vcmask 64512
    %v402 = vsel %vm401, %v400, -inf
    %403 = vmax.xlane.f32.xlu0 %v402
    %v404 = vpop.xlane.xlu0 %403
    %v405 = vsub.f32 %v400, %v404
    %v406 = vmul.f32 %v405, 1.442695
    %v407 = vpow.pop %v406
    %v408 = vsel %vm401, %v407, 0.0
    %409 = vadd.xlane.f32.xlu0 %v408
    %v410 = vpop.xlane.xlu0 %409
    %v411 = vlog2.pop %v410
    %v412 = vmul.f32 %v411, 0.6931472
    %v413 = vadd.f32 %v404, %v412
    %v414 = vsub.f32 %v413, %v400
    %v415 = vmul.f32 %v397, %v414
    %v416 = vsel %vm401, %v415, 0.0
    %417 = vadd.xlane.f32.xlu0 %v416
    %v418 = vpop.xlane.xlu0 %417
    %v419 = vrot.slane %v418, 4
    %v420 = vadd.f32 %v418, %v419
    %v421 = vrot.slane %v420, 2
    %v422 = vadd.f32 %v420, %v421
    %v423 = vrot.slane %v422, 1
    %v424 = vadd.f32 %v422, %v423
    %s425 = vtos %v424
    %s426 = smul.f32 %s425, 0.125
    %s427 = scalar_lea.smem [#allocation5], 0
    %428 = sst [smem:[%s427]] %s426
    %p429 = scmp.eq.s32.totalorder 0, 0
    // Predicated region
    $region18: #{tpu_custom_call.1} parent=1 // pred_check
      %p430 = pneg %p429
    $region19: #{tpu_custom_call.1} parent=1 // pred_check_branch
      %432 = sbr.rel (%p430) target = $region21
    $region20: #{tpu_custom_call.1} parent=1 // pred_region
      %v433 = vmul.f32 %v66, %v67
      %v434 = vsel %vm31, %v433, 0.0
      %435 = vadd.xlane.f32.xlu0 %v434
      %v436 = vpop.xlane.xlu0 %435
      %v437 = vmul.f32 %v436, 2.0
      %v438 = vsub.f32 2.00001, %v437
      %v439 = vrsqrt.pop %v438
      %v440 = vmul.f32 %v438, %v439
      %vm441 = vcmp.eq.f32.partialorder %v438, inf
      %v442 = vsel %vm441, %v438, %v440
      %vm443 = vcmp.eq.f32.partialorder %v438, 0.0
      %v444 = vand.u32 %v438, 2147483648
      %v445 = vsel %vm443, %v444, %v442
      %vm446 = vcmask 7168
      %v447 = vsel %vm446, %v445, 0.0
      %448 = vadd.xlane.f32.xlu0 %v447
      %v449 = vpop.xlane.xlu0 %448
      %v450 = vrot.slane %v449, 4
      %v451 = vadd.f32 %v449, %v450
      %v452 = vrot.slane %v451, 2
      %v453 = vadd.f32 %v451, %v452
      %v454 = vrot.slane %v453, 1
      %v455 = vadd.f32 %v453, %v454
      %s456 = vtos %v455
      %s457 = sadd.f32 %s456, 0.0
      %v458 = vmul.f32 %v66, %v68
      %v459 = vsel %vm31, %v458, 0.0
      %460 = vadd.xlane.f32.xlu0 %v459
      %v461 = vpop.xlane.xlu0 %460
      %v462 = vmul.f32 %v461, 2.0
      %v463 = vsub.f32 2.00001, %v462
      %v464 = vrsqrt.pop %v463
      %v465 = vmul.f32 %v463, %v464
      %vm466 = vcmp.eq.f32.partialorder %v463, inf
      %v467 = vsel %vm466, %v463, %v465
      %vm468 = vcmp.eq.f32.partialorder %v463, 0.0
      %v469 = vand.u32 %v463, 2147483648
      %v470 = vsel %vm468, %v469, %v467
      %v471 = vsel %vm446, %v470, 0.0
      %472 = vadd.xlane.f32.xlu0 %v471
      %v473 = vpop.xlane.xlu0 %472
      %v474 = vrot.slane %v473, 4
      %v475 = vadd.f32 %v473, %v474
      %v476 = vrot.slane %v475, 2
      %v477 = vadd.f32 %v475, %v476
      %v478 = vrot.slane %v477, 1
      %v479 = vadd.f32 %v477, %v478
      %s480 = vtos %v479
      %s481 = sadd.f32 %s457, %s480
      %v482 = vmul.f32 %v66, %v69
      %v483 = vsel %vm31, %v482, 0.0
      %484 = vadd.xlane.f32.xlu0 %v483
      %v485 = vpop.xlane.xlu0 %484
      %v486 = vmul.f32 %v485, 2.0
      %v487 = vsub.f32 2.00001, %v486
      %v488 = vrsqrt.pop %v487
      %v489 = vmul.f32 %v487, %v488
      %vm490 = vcmp.eq.f32.partialorder %v487, inf
      %v491 = vsel %vm490, %v487, %v489
      %vm492 = vcmp.eq.f32.partialorder %v487, 0.0
      %v493 = vand.u32 %v487, 2147483648
      %v494 = vsel %vm492, %v493, %v491
      %v495 = vsel %vm446, %v494, 0.0
      %496 = vadd.xlane.f32.xlu0 %v495
      %v497 = vpop.xlane.xlu0 %496
      %v498 = vrot.slane %v497, 4
      %v499 = vadd.f32 %v497, %v498
      %v500 = vrot.slane %v499, 2
      %v501 = vadd.f32 %v499, %v500
      %v502 = vrot.slane %v501, 1
      %v503 = vadd.f32 %v501, %v502
      %s504 = vtos %v503
      %s505 = sadd.f32 %s481, %s504
      %v506 = vmul.f32 %v67, %v68
      %v507 = vsel %vm31, %v506, 0.0
      %508 = vadd.xlane.f32.xlu0 %v507
      %v509 = vpop.xlane.xlu0 %508
      %v510 = vmul.f32 %v509, 2.0
      %v511 = vsub.f32 2.00001, %v510
      %v512 = vrsqrt.pop %v511
      %v513 = vmul.f32 %v511, %v512
      %vm514 = vcmp.eq.f32.partialorder %v511, inf
      %v515 = vsel %vm514, %v511, %v513
      %vm516 = vcmp.eq.f32.partialorder %v511, 0.0
      %v517 = vand.u32 %v511, 2147483648
      %v518 = vsel %vm516, %v517, %v515
      %v519 = vsel %vm446, %v518, 0.0
      %520 = vadd.xlane.f32.xlu0 %v519
      %v521 = vpop.xlane.xlu0 %520
      %v522 = vrot.slane %v521, 4
      %v523 = vadd.f32 %v521, %v522
      %v524 = vrot.slane %v523, 2
      %v525 = vadd.f32 %v523, %v524
      %v526 = vrot.slane %v525, 1
      %v527 = vadd.f32 %v525, %v526
      %s528 = vtos %v527
      %s529 = sadd.f32 %s505, %s528
      %v530 = vmul.f32 %v67, %v69
      %v531 = vsel %vm31, %v530, 0.0
      %532 = vadd.xlane.f32.xlu0 %v531
      %v533 = vpop.xlane.xlu0 %532
      %v534 = vmul.f32 %v533, 2.0
      %v535 = vsub.f32 2.00001, %v534
      %v536 = vrsqrt.pop %v535
      %v537 = vmul.f32 %v535, %v536
      %vm538 = vcmp.eq.f32.partialorder %v535, inf
      %v539 = vsel %vm538, %v535, %v537
      %vm540 = vcmp.eq.f32.partialorder %v535, 0.0
      %v541 = vand.u32 %v535, 2147483648
      %v542 = vsel %vm540, %v541, %v539
      %v543 = vsel %vm446, %v542, 0.0
      %544 = vadd.xlane.f32.xlu0 %v543
      %v545 = vpop.xlane.xlu0 %544
      %v546 = vrot.slane %v545, 4
      %v547 = vadd.f32 %v545, %v546
      %v548 = vrot.slane %v547, 2
      %v549 = vadd.f32 %v547, %v548
      %v550 = vrot.slane %v549, 1
      %v551 = vadd.f32 %v549, %v550
      %s552 = vtos %v551
      %s553 = sadd.f32 %s529, %s552
      %v554 = vmul.f32 %v68, %v69
      %v555 = vsel %vm31, %v554, 0.0
      %556 = vadd.xlane.f32.xlu0 %v555
      %v557 = vpop.xlane.xlu0 %556
      %v558 = vmul.f32 %v557, 2.0
      %v559 = vsub.f32 2.00001, %v558
      %v560 = vrsqrt.pop %v559
      %v561 = vmul.f32 %v559, %v560
      %vm562 = vcmp.eq.f32.partialorder %v559, inf
      %v563 = vsel %vm562, %v559, %v561
      %vm564 = vcmp.eq.f32.partialorder %v559, 0.0
      %v565 = vand.u32 %v559, 2147483648
      %v566 = vsel %vm564, %v565, %v563
      %v567 = vsel %vm446, %v566, 0.0
      %568 = vadd.xlane.f32.xlu0 %v567
      %v569 = vpop.xlane.xlu0 %568
      %v570 = vrot.slane %v569, 4
      %v571 = vadd.f32 %v569, %v570
      %v572 = vrot.slane %v571, 2
      %v573 = vadd.f32 %v571, %v572
      %v574 = vrot.slane %v573, 1
      %v575 = vadd.f32 %v573, %v574
      %s576 = vtos %v575
      %s577 = sadd.f32 %s553, %s576
      %s578 = sld [smem:[#allocation5]]
      %v579 = vrcp.pop 96.0
      %s580 = vtos %v579
      %s581 = smul.f32 %s577, %s580
      %s582 = smul.f32 %s581, 0.2
      %s583 = sadd.f32 %s578, %s582
      %584 = sst [smem:[%s427]] %s583
    $region21: #{tpu_custom_call.1} parent=1 // pred_fallthru
      _
    // Predicated region
    $region22: #{tpu_custom_call.1} parent=1 // pred_check
      _
    $region23: #{tpu_custom_call.1} parent=1 // pred_check_branch
      %586 = sbr.rel (0) target = $region25
    $region24: #{tpu_custom_call.1} parent=1 // pred_region
      %s588 = ssub.s32 16, 16
      %589 = vsyncadd [#allocation4], %s588
      %592 = dma.smem_to_hbm [#allocation5], 16, %s3, [#allocation4]
    $region25: #{tpu_custom_call.1} parent=1 // pred_fallthru
      _
    // Predicated region
    $region26: #{tpu_custom_call.1} parent=1 // pred_check
      _
    $region27: #{tpu_custom_call.1} parent=1 // pred_check_branch
      %594 = sbr.rel (0) target = $region29
    $region28: #{tpu_custom_call.1} parent=1 // pred_region
      %595 = dma.done [#allocation4], 16
    $region29: #{tpu_custom_call.1} parent=1 // pred_fallthru
      _
    %596 = sfence
    %597 = vsyncpa [#allocation3], 1
    %598 = vsyncpa [#allocation4], 1

</llo_original>
